<compile_context>
chip_gen: v7x
topology: tpu7x:2x2x1
jax: 0.10.0
libtpu: 0.0.40
codegen_flags: <defaults>
</compile_context>

<pallas_src>
import functools

import jax
import jax.numpy as jnp
from jax import lax
from jax.experimental import pallas as pl
from jax.experimental.pallas import tpu as pltpu

_LANES = 128
_DEFAULT_BLOCK_BYTES = 2 * 1024 * 1024   # per-input block target (sweepable)
_SMALL_N_THRESHOLD = 32768               # below this, fused XLA wins; re-sweep per gen
_VMEM_LIMIT_BYTES = 40 * 1024 * 1024     # fits v7x 64 MiB physical with headroom


def _qwk_partial_kernel(p_ref, t_ref, out_ref, *,
                        tile_rows, valid_rows, blocks_per_core,
                        mask_start, need_mask):
    c = pl.program_id(0)          # TensorCore split (2 on v7x, sequential elsewhere)
    i = pl.program_id(1)          # row-block within this core's range

    @pl.when(i == 0)
    def _():
        out_ref[...] = jnp.zeros_like(out_ref)

    # Hot path: upcast -> clamp -> diff (pure VALU work, hidden under DMA).
    p = jnp.clip(p_ref[...].astype(jnp.float32), 0.0, 4.0)
    t = t_ref[...].astype(jnp.float32)
    d = p - t

    def fold(sq):
        # Fold sublane groups into the resident (8, 128) accumulator with
        # elementwise adds only; no cross-lane/XLU reduction in the hot loop.
        return jnp.sum(sq.reshape(tile_rows // 8, 8, _LANES), axis=0)

    if need_mask:
        b = c * blocks_per_core + i          # global row-block index (scalar)

        @pl.when(b < mask_start)
        def _():                              # full blocks: no mask work at all
            out_ref[...] += fold(d * d)

        @pl.when(b >= mask_start)
        def _():                              # partial / ghost blocks only
            row = lax.broadcasted_iota(jnp.int32, (tile_rows, _LANES), 0)
            limit = valid_rows - b * tile_rows   # scalar; <= 0 for ghost blocks
            dm = jnp.where(row < limit, d, 0.0)  # mask BEFORE squaring
            out_ref[...] += fold(dm * dm)
    else:
        out_ref[...] += fold(d * d)


def qwk_loss(preds, targets, *,
             small_n_threshold=_SMALL_N_THRESHOLD,
             block_bytes=_DEFAULT_BLOCK_BYTES):
    """clamp(preds, 0, 4) then mean squared error vs targets (scalar f32)."""
    assert preds.shape == targets.shape
    p = preds.reshape(-1)
    t = targets.reshape(-1)
    n = p.shape[0]

    if n == 0 or n < small_n_threshold:
        # Fast path: fused XLA clamp + MSE beats pallas_call fixed overhead.
        pf = jnp.clip(p.astype(jnp.float32), 0.0, 4.0)
        return jnp.mean((pf - t.astype(jnp.float32)) ** 2)

    itemsize = jnp.dtype(p.dtype).itemsize
    sublane = max(8, 32 // max(itemsize, 1))   # 8 (f32), 16 (bf16/f16), 32 (int8)

    # Pad only when the flat length is not a multiple of 128 lanes; zero pad
    # contributes exactly 0 (clamp(0)=0, target pad 0).
    pad = (-n) % _LANES
    if pad:
        # TODO(synk): for very large unaligned inputs this full-array pad copy
        # roughly triples HBM traffic; a 1-D-blocked variant with full
        # in-kernel element masking would avoid the copy entirely.
        p = jnp.pad(p, (0, pad))
        t = jnp.pad(t, (0, pad))

    rows = (n + pad) // _LANES
    p2 = p.reshape(rows, _LANES)   # contiguous reshape: free
    t2 = t.reshape(rows, _LANES)

    # Size the tile by bytes so per-step DMA time is dtype-independent.
    tile_rows = max(sublane, (block_bytes // (_LANES * itemsize)) // sublane * sublane)
    rows_rounded = pl.cdiv(rows, sublane) * sublane
    tile_rows = min(tile_rows, rows_rounded)

    n_blocks = pl.cdiv(rows, tile_rows)        # real row-blocks
    blocks_per_core = pl.cdiv(n_blocks, 2)     # leading axis = 2 cores (v7x megacore)
    covered = 2 * blocks_per_core

    partial_last = (rows % tile_rows) != 0
    need_mask = partial_last or (covered > n_blocks)
    mask_start = n_blocks - 1 if partial_last else n_blocks

    def in_map(c, i):
        # Clamp ghost blocks (odd block count) onto the last real block; their
        # contribution is fully masked out inside the kernel.
        return (jnp.minimum(c * blocks_per_core + i, n_blocks - 1), 0)

    kernel = functools.partial(
        _qwk_partial_kernel,
        tile_rows=tile_rows,
        valid_rows=rows,
        blocks_per_core=blocks_per_core,
        mask_start=mask_start,
        need_mask=need_mask,
    )

    # Output: one lane-dense (8, 128) partial-sum slab per core.
    partials = pl.pallas_call(
        kernel,
        out_shape=jax.ShapeDtypeStruct((2 * 8, _LANES), jnp.float32),
        grid_spec=pltpu.PrefetchScalarGridSpec(
            num_scalar_prefetch=0,
            grid=(2, blocks_per_core),
            in_specs=[
                pl.BlockSpec((tile_rows, _LANES), in_map),
                pl.BlockSpec((tile_rows, _LANES), in_map),
            ],
            out_specs=pl.BlockSpec((8, _LANES), lambda c, i: (c, 0)),
        ),
        compiler_params=pltpu.CompilerParams(
            dimension_semantics=("parallel", "arbitrary"),
            vmem_limit_bytes=_VMEM_LIMIT_BYTES,
        ),
    )(p2, t2)

    # Tiny final reduce + normalize in XLA (2*8*128 elements).
    return jnp.sum(partials) / jnp.float32(n)


def _reference(preds, targets):
    p = jnp.clip(preds.astype(jnp.float32), 0.0, 4.0)
    return jnp.mean((p - targets.astype(jnp.float32)) ** 2)


if __name__ == "__main__":
    key = jax.random.PRNGKey(0)
    k1, k2, k3, k4, k5, k6, k7, k8 = jax.random.split(key, 8)

    # Case 1: tiny regression-head batch (16, 1).  Exercises the small-N fast
    # path AND the forced kernel path (single partial block + ghost block).
    preds_s = jax.random.uniform(k1, (16, 1), jnp.float32, -1.0, 6.0)
    targets_s = jax.random.randint(k2, (16, 1), 0, 5).astype(jnp.float32)
    ref_s = _reference(preds_s, targets_s)
    fast_s = qwk_loss(preds_s, targets_s)                        # fast path
    kern_s = qwk_loss(preds_s, targets_s, small_n_threshold=0)   # forced kernel
    jax.block_until_ready((fast_s, kern_s, ref_s))
    assert jnp.allclose(fast_s, ref_s, rtol=1e-4, atol=1e-5), (fast_s, ref_s)
    assert jnp.allclose(kern_s, ref_s, rtol=1e-4, atol=1e-5), (kern_s, ref_s)

    # Case 2: unaligned size, multiple row-blocks per core, masked partial last
    # block and a masked ghost block (small block_bytes to force multi-step).
    preds_m = jax.random.uniform(k3, (2500, 1), jnp.float32, -1.0, 6.0)
    targets_m = jax.random.randint(k4, (2500, 1), 0, 5).astype(jnp.float32)
    ref_m = _reference(preds_m, targets_m)
    kern_m = qwk_loss(preds_m, targets_m, small_n_threshold=0, block_bytes=4096)
    jax.block_until_ready(kern_m)
    assert jnp.allclose(kern_m, ref_m, rtol=1e-4, atol=1e-5), (kern_m, ref_m)

    # Case 3: bf16 inputs, lane-aligned length (no wrapper pad, in-kernel upcast).
    preds_b = jax.random.uniform(k5, (4096, 1), jnp.float32, -1.0, 6.0).astype(jnp.bfloat16)
    targets_b = jax.random.randint(k6, (4096, 1), 0, 5).astype(jnp.bfloat16)
    ref_b = _reference(preds_b, targets_b)
    kern_b = qwk_loss(preds_b, targets_b, small_n_threshold=0)
    jax.block_until_ready(kern_b)
    assert jnp.allclose(kern_b, ref_b, rtol=1e-4, atol=1e-5), (kern_b, ref_b)

    # Case 4: aligned (1024, 128) f32, even split across both cores, no masking
    # (the fully static unmasked hot path).
    preds_l = jax.random.uniform(k7, (1024, 128), jnp.float32, -1.0, 6.0)
    targets_l = jax.random.randint(k8, (1024, 128), 0, 5).astype(jnp.float32)
    ref_l = _reference(preds_l, targets_l)
    kern_l = qwk_loss(preds_l, targets_l, small_n_threshold=0,
                      block_bytes=128 * _LANES * 4)
    jax.block_until_ready(kern_l)
    assert jnp.allclose(kern_l, ref_l, rtol=1e-4, atol=1e-5), (kern_l, ref_l)

    print("KERNEL_OK")
</pallas_src>

<mosaic_0001>
module attributes {stable_mosaic.version = 11 : i64} {
  func.func @_qwk_partial_kernel(%arg0: i32, %arg1: i32, %arg2: memref<8x128xf32, #tpu.memory_space<vmem>>, %arg3: memref<8x128xf32, #tpu.memory_space<vmem>>, %arg4: memref<8x128xf32, #tpu.memory_space<vmem>>) attributes {dimension_semantics = [#tpu.dimension_semantics<parallel>, #tpu.dimension_semantics<arbitrary>], iteration_bounds = array<i64: 2, 1>, scalar_prefetch = 0 : i64, scratch_operands = 0 : i64, tpu.core_type = #tpu.core_type<tc>, window_params = [{transform_indices = @transform_0, window_bounds = array<i64: 8, 128>}, {transform_indices = @transform_1, window_bounds = array<i64: 8, 128>}, {transform_indices = @transform_2, window_bounds = array<i64: 8, 128>}]} {
    %c0_i32 = arith.constant 0 : i32
    %0 = arith.cmpi eq, %arg1, %c0_i32 : i32
    %1 = arith.extui %0 : i1 to i32
    %c0_i32_0 = arith.constant 0 : i32
    %2 = arith.cmpi ne, %1, %c0_i32_0 : i32
    scf.if %2 {
      %cst_9 = arith.constant 0.000000e+00 : f32
      %18 = vector.broadcast %cst_9 : f32 to vector<8x128xf32>
      %c0_10 = arith.constant 0 : index
      %c0_11 = arith.constant 0 : index
      %19 = vector.load %arg4[%c0_10, %c0_11] : memref<8x128xf32, #tpu.memory_space<vmem>>, vector<8x128xf32>
      tpu.vector_store %arg4[%c0_10, %c0_11], %18 {strides = array<i32>} : memref<8x128xf32, #tpu.memory_space<vmem>>, vector<8x128xf32>,
    } else {
    }
    %c0 = arith.constant 0 : index
    %c0_1 = arith.constant 0 : index
    %3 = vector.load %arg2[%c0, %c0_1] : memref<8x128xf32, #tpu.memory_space<vmem>>, vector<8x128xf32>
    %cst = arith.constant 0.000000e+00 : f32
    %cst_2 = arith.constant 4.000000e+00 : f32
    %4 = vector.broadcast %cst : f32 to vector<8x128xf32>
    %5 = arith.maximumf %4, %3 : vector<8x128xf32>
    %6 = vector.broadcast %cst_2 : f32 to vector<8x128xf32>
    %7 = arith.minimumf %6, %5 : vector<8x128xf32>
    %c0_3 = arith.constant 0 : index
    %c0_4 = arith.constant 0 : index
    %8 = vector.load %arg3[%c0_3, %c0_4] : memref<8x128xf32, #tpu.memory_space<vmem>>, vector<8x128xf32>
    %9 = arith.subf %7, %8 : vector<8x128xf32>
    %c1_i32 = arith.constant 1 : i32
    %10 = arith.muli %arg0, %c1_i32 : i32
    %11 = arith.addi %10, %arg1 : i32
    %c0_i32_5 = arith.constant 0 : i32
    %12 = arith.cmpi slt, %11, %c0_i32_5 : i32
    %13 = arith.extui %12 : i1 to i32
    %c0_i32_6 = arith.constant 0 : i32
    %14 = arith.cmpi ne, %13, %c0_i32_6 : i32
    scf.if %14 {
      %c0_9 = arith.constant 0 : index
      %c0_10 = arith.constant 0 : index
      %18 = vector.load %arg4[%c0_9, %c0_10] : memref<8x128xf32, #tpu.memory_space<vmem>>, vector<8x128xf32>
      %19 = arith.mulf %9, %9 : vector<8x128xf32>
      %20 = vector.shape_cast %19 : vector<8x128xf32> to vector<1x8x128xf32>
      %cst_11 = arith.constant dense<0.000000e+00> : vector<8x128xf32>
      %21 = vector.multi_reduction <add>, %20, %cst_11 [0] : vector<1x8x128xf32> to vector<8x128xf32>
      %22 = arith.addf %18, %21 : vector<8x128xf32>
      %c0_12 = arith.constant 0 : index
      %c0_13 = arith.constant 0 : index
      %23 = vector.load %arg4[%c0_12, %c0_13] : memref<8x128xf32, #tpu.memory_space<vmem>>, vector<8x128xf32>
      tpu.vector_store %arg4[%c0_12, %c0_13], %22 {strides = array<i32>} : memref<8x128xf32, #tpu.memory_space<vmem>>, vector<8x128xf32>,
    } else {
    }
    %c0_i32_7 = arith.constant 0 : i32
    %15 = arith.cmpi sge, %11, %c0_i32_7 : i32
    %16 = arith.extui %15 : i1 to i32
    %c0_i32_8 = arith.constant 0 : i32
    %17 = arith.cmpi ne, %16, %c0_i32_8 : i32
    scf.if %17 {
      %18 = tpu.iota {dimensions = array<i32: 0>} : vector<8x128xi32>
      %c8_i32 = arith.constant 8 : i32
      %19 = arith.muli %11, %c8_i32 : i32
      %c1_i32_9 = arith.constant 1 : i32
      %20 = arith.subi %c1_i32_9, %19 : i32
      %21 = vector.broadcast %20 : i32 to vector<8x128xi32>
      %22 = arith.cmpi slt, %18, %21 : vector<8x128xi32>
      %cst_10 = arith.constant 0.000000e+00 : f32
      %23 = vector.broadcast %cst_10 : f32 to vector<8x128xf32>
      %24 = arith.select %22, %9, %23 : vector<8x128xi1>, vector<8x128xf32>
      %c0_11 = arith.constant 0 : index
      %c0_12 = arith.constant 0 : index
      %25 = vector.load %arg4[%c0_11, %c0_12] : memref<8x128xf32, #tpu.memory_space<vmem>>, vector<8x128xf32>
      %26 = arith.mulf %24, %24 : vector<8x128xf32>
      %27 = vector.shape_cast %26 : vector<8x128xf32> to vector<1x8x128xf32>
      %cst_13 = arith.constant dense<0.000000e+00> : vector<8x128xf32>
      %28 = vector.multi_reduction <add>, %27, %cst_13 [0] : vector<1x8x128xf32> to vector<8x128xf32>
      %29 = arith.addf %25, %28 : vector<8x128xf32>
      %c0_14 = arith.constant 0 : index
      %c0_15 = arith.constant 0 : index
      %30 = vector.load %arg4[%c0_14, %c0_15] : memref<8x128xf32, #tpu.memory_space<vmem>>, vector<8x128xf32>
      tpu.vector_store %arg4[%c0_14, %c0_15], %29 {strides = array<i32>} : memref<8x128xf32, #tpu.memory_space<vmem>>, vector<8x128xf32>,
    } else {
    }
    return
  }
  func.func @transform_0(%arg0: i32, %arg1: i32) -> (i32, i32) {
    %c1_i32 = arith.constant 1 : i32
    %0 = arith.muli %arg0, %c1_i32 : i32
    %1 = arith.addi %0, %arg1 : i32
    %c0_i32 = arith.constant 0 : i32
    %2 = arith.minsi %1, %c0_i32 : i32
    %c0_i32_0 = arith.constant 0 : i32
    %c0_i32_1 = arith.constant 0 : i32
    return %2, %c0_i32_0 : i32, i32
  }
  func.func @transform_1(%arg0: i32, %arg1: i32) -> (i32, i32) {
    %c1_i32 = arith.constant 1 : i32
    %0 = arith.muli %arg0, %c1_i32 : i32
    %1 = arith.addi %0, %arg1 : i32
    %c0_i32 = arith.constant 0 : i32
    %2 = arith.minsi %1, %c0_i32 : i32
    %c0_i32_0 = arith.constant 0 : i32
    %c0_i32_1 = arith.constant 0 : i32
    return %2, %c0_i32_0 : i32, i32
  }
  func.func @transform_2(%arg0: i32, %arg1: i32) -> (i32, i32) {
    %c0_i32 = arith.constant 0 : i32
    %c0_i32_0 = arith.constant 0 : i32
    return %arg0, %c0_i32 : i32, i32
  }
}

</mosaic_0001>

<llo_original>
// kernel: tpu_custom_call.1
$region0: #{tpu_custom_call.1}
  #allocation0 [shape = 'u32[]', space=smem, size = 0x4, offset = 0x4, fixed_abs, tag = 'smem constant byte address 0x4 - core index']
  #allocation1 [shape = 'u32[144,128]{1,0:T(1,128)}', space=vmem, size = 0x12000, scoped, tag = 'internal scratch']
  %s0 = inlined_call_operand.hbm [shape: f32[1,128], index: 0, kind: input, shape index: {}]
  %s1 = inlined_call_operand.vmem [shape: f32[1,128], index: 1, kind: input, shape index: {}]
  %s2 = inlined_call_operand.hbm [shape: f32[16,128], index: 2, kind: output, shape index: {}]
  %s3 = sld [smem:[#allocation0]]
  $region57: #{tpu_custom_call.1} parent=0
    _
  %s5 = ssub.s32 1, %s3
  %s6 = scalar_select 0, %s5, %s3
  $region1: #{tpu_custom_call.1} parent=0
    #allocation2 [shape = 'u8[8192]{0}', space=vmem, size = 0x2000, scoped, tag = 'input window, operand 0']
    #allocation3 [shape = 's32[2]{0}', space=sflag, size = 0x8, scoped, tag = 'scoped memory for tpu_custom_call.1']
    #allocation4 [shape = 's32[2]{0}', space=sflag, size = 0x8, scoped, tag = 'scoped memory for tpu_custom_call.1']
    #allocation5 [shape = 'u8[8192]{0}', space=vmem, size = 0x2000, scoped, tag = 'output window, operand 0']
    %7 = vsyncpa [#allocation3], 0
    %s8 = scalar_lea.sflag [#allocation3], 1
    %9 = vsyncpa %s8, 0
    %10 = vsyncpa [#allocation4], 0
    %s11 = scalar_lea.sflag [#allocation4], 1
    %12 = vsyncpa %s11, 0
    loop: start=0, step=1, limit=4
    $region2: #{tpu_custom_call.1} parent=1 // loop_pre_header
      _
    $region3: #{tpu_custom_call.1} parent=1 // loop_header
      %s14 = sphi 0, %s18
      %p15 = scmp.ge.s32.totalorder %s14, 4
      %s21 = sphi 0, %s33
      %s22 = sphi 0, %s29
      %s23 = sphi 0, %s21
      %s24 = sphi 0, %s22
      %s25 = sphi 0, %s23
      %s26 = sphi 0, %s24
      %s42 = sphi 0, %s44
      %s45 = sphi 0, %s42
      %s46 = sphi 0, %s45
      %s62 = sphi 0, %s46
      %s74 = sphi 0, %s76
      %s77 = sphi 0, %s74
      %s78 = sphi 0, %s77
      %s94 = sphi 0, %s78
      %s100 = sphi 0, %s102
      %s103 = sphi 0, %s100
      %s104 = sphi 0, %s103
      %s120 = sphi 0, %s104
    $region4: #{tpu_custom_call.1} parent=1 // loop_header_branch
      %17 = sbr.rel (%p15) target = $region8
    $region5: #{tpu_custom_call.1} parent=1 // loop_body
      %s19 = ssub.s32 %s14, 1
      %s20 = ssub.s32 %s14, 2
      %s27 = sadd.s32 1, %s22
      %p28 = scmp.ge.s32.totalorder %s27, 1
      %s29 = scalar_select %p28, 0, %s27
      %s30 = sadd.s32 1, %s21
      %s31 = scalar_select %p28, %s30, %s21
      %p32 = scmp.ge.s32.totalorder %s31, 2
      %s33 = scalar_select %p32, 0, %s31
      %s34 = sadd.s32 %s21, %s22
      %p35 = scmp.lt.s32.totalorder %s34, 0
      %s36 = scalar_select %p35, %s34, 0
      %s37 = sadd.s32 %s33, %s29
      %p38 = scmp.lt.s32.totalorder %s37, 0
      %s39 = scalar_select %p38, %s37, 0
      %s40 = ssub.s32 %s36, %s39
      %p41 = scmp.eq.s32.totalorder %s40, 0
      %s43 = sadd.s32 %s42, 1
      %s44 = scalar_select %p41, %s42, %s43
      %p47 = pneg %p41
      %p48 = scmp.eq.s32.totalorder %s14, 1
      %p49 = por %p47, %p48
      %p50 = scmp.ne.s32.totalorder %s42, %s45
      %p51 = scmp.eq.s32.totalorder %s14, 0
      %p52 = por %p50, %p51
      %p53 = scmp.ne.s32.totalorder %s42, %s45
      %p54 = scmp.eq.s32.totalorder %s19, 1
      %p55 = por %p53, %p54
      %p56 = scmp.ne.s32.totalorder %s45, %s46
      %p57 = scmp.eq.s32.totalorder %s19, 0
      %p58 = por %p56, %p57
      %p59 = scmp.ne.s32.totalorder %s45, %s46
      %p60 = scmp.eq.s32.totalorder %s20, 1
      %p61 = por %p59, %p60
      %p63 = scmp.ne.s32.totalorder %s46, %s62
      %p64 = scmp.eq.s32.totalorder %s20, 0
      %p65 = por %p63, %p64
      %s66 = sadd.s32 %s21, %s22
      %p67 = scmp.lt.s32.totalorder %s66, 0
      %s68 = scalar_select %p67, %s66, 0
      %s69 = sadd.s32 %s33, %s29
      %p70 = scmp.lt.s32.totalorder %s69, 0
      %s71 = scalar_select %p70, %s69, 0
      %s72 = ssub.s32 %s68, %s71
      %p73 = scmp.eq.s32.totalorder %s72, 0
      %s75 = sadd.s32 %s74, 1
      %s76 = scalar_select %p73, %s74, %s75
      %p79 = pneg %p73
      %p80 = scmp.eq.s32.totalorder %s14, 1
      %p81 = por %p79, %p80
      %p82 = scmp.ne.s32.totalorder %s74, %s77
      %p83 = scmp.eq.s32.totalorder %s14, 0
      %p84 = por %p82, %p83
      %p85 = scmp.ne.s32.totalorder %s74, %s77
      %p86 = scmp.eq.s32.totalorder %s19, 1
      %p87 = por %p85, %p86
      %p88 = scmp.ne.s32.totalorder %s77, %s78
      %p89 = scmp.eq.s32.totalorder %s19, 0
      %p90 = por %p88, %p89
      %p91 = scmp.ne.s32.totalorder %s77, %s78
      %p92 = scmp.eq.s32.totalorder %s20, 1
      %p93 = por %p91, %p92
      %p95 = scmp.ne.s32.totalorder %s78, %s94
      %p96 = scmp.eq.s32.totalorder %s20, 0
      %p97 = por %p95, %p96
      %s98 = ssub.s32 %s21, %s33
      %p99 = scmp.eq.s32.totalorder %s98, 0
      %s101 = sadd.s32 %s100, 1
      %s102 = scalar_select %p99, %s100, %s101
      %p105 = pneg %p99
      %p106 = scmp.eq.s32.totalorder %s14, 1
      %p107 = por %p105, %p106
      %p108 = scmp.ne.s32.totalorder %s100, %s103
      %p109 = scmp.eq.s32.totalorder %s14, 0
      %p110 = por %p108, %p109
      %p111 = scmp.ne.s32.totalorder %s100, %s103
      %p112 = scmp.eq.s32.totalorder %s19, 1
      %p113 = por %p111, %p112
      %p114 = scmp.ne.s32.totalorder %s103, %s104
      %p115 = scmp.eq.s32.totalorder %s19, 0
      %p116 = por %p114, %p115
      %p117 = scmp.ne.s32.totalorder %s103, %s104
      %p118 = scmp.eq.s32.totalorder %s20, 1
      %p119 = por %p117, %p118
      %p121 = scmp.ne.s32.totalorder %s104, %s120
      %p122 = scmp.eq.s32.totalorder %s20, 0
      %p123 = por %p121, %p122
      %p124 = scmp.le.s32.totalorder 1, %s14
      %p125 = scmp.lt.s32.totalorder %s14, 3
      %p126 = pnand %p124, %p125
      %p127 = pneg %p126
      // Predicated region
      $region9: #{tpu_custom_call.1} parent=5 // pred_check
        _
      $region10: #{tpu_custom_call.1} parent=5 // pred_check_branch
        %129 = sbr.rel (%p126) target = $region12
      $region11: #{tpu_custom_call.1} parent=5 // pred_region
        %s130 = ssub.s32 %s14, 1
      $region12: #{tpu_custom_call.1} parent=5 // pred_fallthru
        _
      %p131 = scmp.lt.s32.totalorder %s14, 2
      // Predicated region
      $region13: #{tpu_custom_call.1} parent=5 // pred_check
        %p132 = pneg %p131
      $region14: #{tpu_custom_call.1} parent=5 // pred_check_branch
        %134 = sbr.rel (%p132) target = $region16
      $region15: #{tpu_custom_call.1} parent=5 // pred_region
        // Predicated region
        $region17: #{tpu_custom_call.1} parent=15 // pred_check
          %p135 = pneg %p52
        $region18: #{tpu_custom_call.1} parent=15 // pred_check_branch
          %137 = sbr.rel (%p135) target = $region20
        $region19: #{tpu_custom_call.1} parent=15 // pred_region
          %s138 = sand.u32 %s42, 1
          %s139 = scalar_lea.sflag [#allocation3], %s138
          %s140 = sand.u32 %s42, 1
          %s141 = smul.addr %s140, 8
          %s142 = scalar_lea.vmem [#allocation2], %s141
          %s143 = sadd.s32 %s21, %s22
          %p144 = scmp.lt.s32.totalorder %s143, 0
          %s145 = scalar_select %p144, %s143, 0
          %s146 = smul.u32 8, %s145
          %s147 = ssub.s32 1, %s146
          %s148 = smul.u32 16, %s147
          %s150 = ssub.s32 128, %s148
          %151 = vsyncadd %s139, %s150
          %p152 = scmp.ne.s32.totalorder 0, %s148
          %s153 = smul.addr %s146, 16
          %s154 = scalar_lea.hbm %s0, %s153
          %s155 = sshll.u32 %s142, 4
          %s156 = int_to_ptr.vmem [resolvable:$true] %s155
          %s157 = sshll.u32 %s147, 4
          %161 = dma.hbm_to_vmem [thread:$0]  (%p152), %s154, %s157, %s156, %s139, 16, 16, 1
        $region20: #{tpu_custom_call.1} parent=15 // pred_fallthru
          _
        // Predicated region
        $region21: #{tpu_custom_call.1} parent=15 // pred_check
          %p162 = pneg %p84
        $region22: #{tpu_custom_call.1} parent=15 // pred_check_branch
          %164 = sbr.rel (%p162) target = $region24
        $region23: #{tpu_custom_call.1} parent=15 // pred_region
          %s165 = sadd.s32 %s21, %s22
          %p166 = scmp.lt.s32.totalorder %s165, 0
          %s167 = scalar_select %p166, %s165, 0
          %s168 = smul.u32 8, %s167
          %s169 = ssub.s32 1, %s168
          %s170 = smul.u32 16, %s169
          %p171 = scmp.lt.s32.totalorder %s168, 0
          %s172 = scalar_select %p171, %s168, 0
          %s173 = scalar_lea.vmem %s1, %s172
          %s174 = sadd.s32 %s21, %s22
          %p175 = scmp.lt.s32.totalorder %s174, 0
          %s176 = scalar_select %p175, %s174, 0
          %s177 = smul.u32 8, %s176
          %s178 = ssub.s32 1, %s177
          %s179 = smul.u32 16, %s178
        $region24: #{tpu_custom_call.1} parent=15 // pred_fallthru
          _
      $region16: #{tpu_custom_call.1} parent=5 // pred_fallthru
        _
      %p180 = scmp.le.s32.totalorder 1, %s14
      %p181 = scmp.lt.s32.totalorder %s14, 3
      %p182 = pnand %p180, %p181
      %p183 = pneg %p182
      // Predicated region
      $region25: #{tpu_custom_call.1} parent=5 // pred_check
        _
      $region26: #{tpu_custom_call.1} parent=5 // pred_check_branch
        %185 = sbr.rel (%p182) target = $region28
      $region27: #{tpu_custom_call.1} parent=5 // pred_region
        %s186 = ssub.s32 %s14, 1
        %s187 = sand.u32 %s45, 1
        %s188 = scalar_lea.sflag [#allocation3], %s187
        %s189 = sand.u32 %s45, 1
        %s190 = smul.addr %s189, 8
        %s191 = scalar_lea.vmem [#allocation2], %s190
        // Predicated region
        $region29: #{tpu_custom_call.1} parent=27 // pred_check
          %p192 = pneg %p58
        $region30: #{tpu_custom_call.1} parent=27 // pred_check_branch
          %194 = sbr.rel (%p192) target = $region32
        $region31: #{tpu_custom_call.1} parent=27 // pred_region
          %195 = dma.done %s188, 128
        $region32: #{tpu_custom_call.1} parent=27 // pred_fallthru
          _
        %s196 = sand.u32 %s45, 1
        %s197 = scalar_lea.sflag [#allocation3], %s196
        %s198 = sand.u32 %s45, 1
        %s199 = smul.addr %s198, 8
        %s200 = scalar_lea.vmem [#allocation2], %s199
        %p201 = pneg %p58
        %p202 = pneg %p55
        %s203 = sadd.s32 %s23, %s24
        %p204 = scmp.lt.s32.totalorder %s203, 0
        %s205 = scalar_select %p204, %s203, 0
        %s206 = smul.u32 8, %s205
        %s207 = ssub.s32 1, %s206
        %s208 = smul.u32 16, %s207
        %p209 = scmp.lt.s32.totalorder %s206, 0
        %s210 = scalar_select %p209, %s206, 0
        %s211 = scalar_lea.vmem %s1, %s210
        %p212 = pneg %p90
        %p213 = pneg %p87
        %p214 = pneg %p116
        %p215 = pneg %p113
        %s216 = sand.u32 %s103, 1
        %s217 = scalar_lea.sflag [#allocation4], %s216
        %s218 = sand.u32 %s103, 1
        %s219 = smul.addr %s218, 8
        %s220 = scalar_lea.vmem [#allocation5], %s219
        %s221 = sadd.s32 %s23, %s24
        %p222 = scmp.lt.s32.totalorder %s221, 0
        %s223 = scalar_select %p222, %s221, 0
        %s224 = smul.u32 8, %s223
        %s225 = ssub.s32 1, %s224
        %s226 = smul.u32 16, %s225
        %s227 = sadd.s32 %s23, %s24
        %p228 = scmp.lt.s32.totalorder %s227, 0
        %s229 = scalar_select %p228, %s227, 0
        %s230 = smul.u32 8, %s229
        %s231 = ssub.s32 1, %s230
        %s232 = smul.u32 16, %s231
        %p233 = scmp.lt.s32.totalorder %s230, 0
        %s234 = scalar_select %p233, %s230, 0
        %s235 = scalar_lea.vmem %s1, %s234
        %s236 = sadd.s32 %s23, %s24
        %p237 = scmp.lt.s32.totalorder %s236, 0
        %s238 = scalar_select %p237, %s236, 0
        %s239 = smul.u32 8, %s238
        %s240 = ssub.s32 1, %s239
        %s241 = smul.u32 16, %s240
        %p242 = scmp.eq.s32.totalorder %s24, 0
        // Predicated region
        $region33: #{tpu_custom_call.1} parent=27 // pred_check
          %p243 = pneg %p242
        $region34: #{tpu_custom_call.1} parent=27 // pred_check_branch
          %245 = sbr.rel (%p243) target = $region36
        $region35: #{tpu_custom_call.1} parent=27 // pred_region
          %246 = vst [vmem:[%s220] sm:$0xff] 0.0
        $region36: #{tpu_custom_call.1} parent=27 // pred_fallthru
          _
        %v247 = vld [vmem:[%s191] sm:$0xff]
        %v248 = vmax.f32 %v247, 0.0
        %v249 = vmin.f32 %v248, 4.0
        %v250 = vld [vmem:[%s235] sm:$0xff]
        %v251 = vsub.f32 %v249, %v250
        %s252 = sadd.s32 %s23, %s24
        %p253 = scmp.lt.s32.totalorder %s252, 0
        // Predicated region
        $region37: #{tpu_custom_call.1} parent=27 // pred_check
          %p254 = pneg %p253
        $region38: #{tpu_custom_call.1} parent=27 // pred_check_branch
          %256 = sbr.rel (%p254) target = $region40
        $region39: #{tpu_custom_call.1} parent=27 // pred_region
          %v257 = vld [vmem:[%s220] sm:$0xff]
          %v258 = vmul.f32 %v251, %v251
          %v259 = vadd.f32 %v258, 0.0
          %v260 = vadd.f32 %v257, %v259
          %261 = vst [vmem:[%s220] sm:$0xff] %v260
        $region40: #{tpu_custom_call.1} parent=27 // pred_fallthru
          _
        %p262 = scmp.ge.s32.totalorder %s252, 0
        // Predicated region
        $region41: #{tpu_custom_call.1} parent=27 // pred_check
          %p263 = pneg %p262
        $region42: #{tpu_custom_call.1} parent=27 // pred_check_branch
          %265 = sbr.rel (%p263) target = $region44
        $region43: #{tpu_custom_call.1} parent=27 // pred_region
          %v266 = vlaneseq
          %v267 = vshrl.u32 %v266, 7
          %s268 = smul.u32 %s252, 8
          %s269 = ssub.s32 1, %s268
          %v270 = vstv %s269
          %vm271 = vcmp.lt.s32.totalorder %v267, %v270
          %v272 = vsel %vm271, %v251, 0.0
          %v273 = vld [vmem:[%s220] sm:$0xff]
          %v274 = vmul.f32 %v272, %v272
          %v275 = vadd.f32 %v274, 0.0
          %v276 = vadd.f32 %v273, %v275
          %277 = vst [vmem:[%s220] sm:$0xff] %v276
        $region44: #{tpu_custom_call.1} parent=27 // pred_fallthru
          _
        %s278 = sand.u32 %s103, 1
        %s279 = scalar_lea.sflag [#allocation4], %s278
        %s280 = sand.u32 %s103, 1
        %s281 = smul.addr %s280, 8
        %s282 = scalar_lea.vmem [#allocation5], %s281
        // Predicated region
        $region45: #{tpu_custom_call.1} parent=27 // pred_check
          %p283 = pneg %p113
        $region46: #{tpu_custom_call.1} parent=27 // pred_check_branch
          %285 = sbr.rel (%p283) target = $region48
        $region47: #{tpu_custom_call.1} parent=27 // pred_region
          %s287 = ssub.s32 128, 128
          %288 = vsyncadd %s279, %s287
          %s289 = smul.addr %s23, 128
          %s290 = scalar_lea.hbm %s2, %s289
          %s292 = sshll.u32 %s282, 4
          %s293 = int_to_ptr.vmem [resolvable:$true] %s292
          %295 = dma.vmem_to_hbm [thread:$0]  %s293, 128, %s290, %s279
        $region48: #{tpu_custom_call.1} parent=27 // pred_fallthru
          _
      $region28: #{tpu_custom_call.1} parent=5 // pred_fallthru
        _
      %p296 = scmp.le.s32.totalorder 2, %s14
      // Predicated region
      $region49: #{tpu_custom_call.1} parent=5 // pred_check
        %p297 = pneg %p296
      $region50: #{tpu_custom_call.1} parent=5 // pred_check_branch
        %299 = sbr.rel (%p297) target = $region52
      $region51: #{tpu_custom_call.1} parent=5 // pred_region
        %s300 = ssub.s32 %s14, 2
        // Predicated region
        $region53: #{tpu_custom_call.1} parent=51 // pred_check
          %p301 = pneg %p119
        $region54: #{tpu_custom_call.1} parent=51 // pred_check_branch
          %303 = sbr.rel (%p301) target = $region56
        $region55: #{tpu_custom_call.1} parent=51 // pred_region
          %s304 = sand.u32 %s104, 1
          %s305 = scalar_lea.sflag [#allocation4], %s304
          %s306 = sand.u32 %s104, 1
          %s307 = smul.addr %s306, 8
          %s308 = scalar_lea.vmem [#allocation5], %s307
          %309 = dma.done %s305, 128
        $region56: #{tpu_custom_call.1} parent=51 // pred_fallthru
          _
      $region52: #{tpu_custom_call.1} parent=5 // pred_fallthru
        _
    $region6: #{tpu_custom_call.1} parent=1 // loop_footer
      %s18 = sadd.s32 1, %s14
    $region7: #{tpu_custom_call.1} parent=1 // loop_footer_branch
      %13 = sbr.rel target = $region3
    $region8: #{tpu_custom_call.1} parent=1 // loop_exit
      _
    %310 = vsyncpa [#allocation3], 1
    %s311 = scalar_lea.sflag [#allocation3], 1
    %312 = vsyncpa %s311, 1
    %313 = vsyncpa [#allocation4], 1
    %s314 = scalar_lea.sflag [#allocation4], 1
    %315 = vsyncpa %s314, 1

</llo_original>
